<compile_context>
chip_gen: v7x
topology: tpu7x:2x2x1
jax: 0.10.0
libtpu: 0.0.40
codegen_flags: <defaults>
</compile_context>

<pallas_src>
import jax
import jax.numpy as jnp
from jax.experimental import pallas as pl
from jax.experimental.pallas import tpu as pltpu

LANE = 128                     # vreg lane width
MAX_TILE_B = 2048              # upper bound on batch-tile rows
VMEM_BUDGET = 48 * 1024 * 1024 # conservative budget, safe on v7x (64 MiB phys)


def simple_nn_kernel(x_ref, w1_ref, b1_ref, w2_ref, b2_ref, o_ref):
    w1 = w1_ref[...]                       # [I, Hp]  (bf16, lane-dense)
    w2 = w2_ref[...]                       # [Hp, O]  (bf16)

    # Cast the x tile to the weight compute dtype only for the MXU feed; the
    # HBM stream stays whatever dtype the caller provided (no extra pass).
    x = x_ref[...].astype(w1.dtype)        # [tb, I]

    # Layer 1: x @ w1 + b1, ReLU.  f32 accumulation on the MXU; bias /
    # elementwise in f32 (v5e VPU has no bf16).
    h = jnp.dot(x, w1, preferred_element_type=jnp.float32)     # [tb, Hp]
    h = jnp.maximum(h + b1_ref[...], 0.0)                       # b1 [1, Hp] f32

    # Layer 2: h @ w2 + b2, sigmoid * 4 + 1.
    y = jnp.dot(h.astype(w2.dtype), w2,
                preferred_element_type=jnp.float32)             # [tb, O]
    y = jax.nn.sigmoid(y + b2_ref[...]) * 4.0 + 1.0
    o_ref[...] = y.astype(o_ref.dtype)


def _round_up(n, m):
    return ((n + m - 1) // m) * m


def prepare_params(w1, b1, w2, b2, compute_dtype=jnp.bfloat16):
    """One-time parameter prep (do NOT call per forward).

    Transposes PyTorch [out, in] weights to canonical [in, out] layout, casts
    them to the matmul compute dtype (bf16 by default), and zero-pads only the
    hidden dim to the 128-lane width.  Padding is exact: padded hidden lanes
    are 0 after ReLU and multiply into zero rows of w2.  The output dim is NOT
    padded (keeps the HBM write stream minimal).  Biases stay f32.
    """
    H, I = w1.shape
    O = w2.shape[0]
    Hp = _round_up(H, LANE)

    w1p = jnp.zeros((I, Hp), compute_dtype).at[:, :H].set(
        w1.T.astype(compute_dtype))
    b1p = jnp.zeros((1, Hp), jnp.float32).at[0, :H].set(b1.astype(jnp.float32))
    w2p = jnp.zeros((Hp, O), compute_dtype).at[:H, :].set(
        w2.T.astype(compute_dtype))
    b2p = b2.astype(jnp.float32).reshape(1, O)
    return w1p, b1p, w2p, b2p


def _plan_tiles(B, I, O, Hp, x_bytes, w_bytes,
                vmem_budget=VMEM_BUDGET, max_tile_b=MAX_TILE_B):
    """Pick the batch tile and VMEM limit from a sizing formula.

    Budget model: 2 * (x tile + out tile)  [double-buffered]
                  + resident weights/biases [single-buffered, same block
                    every step] + slack  <= vmem_budget.
    Also forces >= 2 even, 8-row-aligned tiles at medium batch so v7x's second
    TensorCore and the input/output double-buffer actually engage.
    """
    resident = (I * Hp + Hp * O) * w_bytes + (Hp + O) * 4
    slack = 2 * 1024 * 1024

    def xout_bytes(tb):
        return 2 * tb * (I * x_bytes + O * 4)

    tb_cap = max_tile_b
    while tb_cap > 8 and resident + xout_bytes(tb_cap) + slack > vmem_budget:
        tb_cap //= 2

    if B <= min(64, tb_cap):
        tb = B                                            # single full-dim tile
    elif B <= 2 * tb_cap:
        tb = min(_round_up(pl.cdiv(B, 2), 8), tb_cap)     # >= 2 even tiles
    else:
        tb = tb_cap

    vmem_limit = min(max(resident + xout_bytes(tb) + slack, 16 * 1024 * 1024),
                     vmem_budget)
    return tb, int(vmem_limit)


def simple_nn_forward(x, w1p, b1p, w2p, b2p):
    """x: [B, I] (f32 or bf16); params from prepare_params; returns [B, O] f32."""
    B, I = x.shape
    Hp = w1p.shape[1]
    O = w2p.shape[1]

    x_bytes = jnp.dtype(x.dtype).itemsize
    w_bytes = jnp.dtype(w1p.dtype).itemsize
    tb, vmem_limit = _plan_tiles(B, I, O, Hp, x_bytes, w_bytes)
    grid = (pl.cdiv(B, tb),)

    return pl.pallas_call(
        simple_nn_kernel,
        out_shape=jax.ShapeDtypeStruct((B, O), jnp.float32),
        grid_spec=pltpu.PrefetchScalarGridSpec(
            num_scalar_prefetch=0,
            grid=grid,
            in_specs=[
                pl.BlockSpec((tb, I), lambda i: (i, 0)),    # x: tiled over batch
                pl.BlockSpec((I, Hp), lambda i: (0, 0)),    # w1: resident, lane-dense
                pl.BlockSpec((1, Hp), lambda i: (0, 0)),    # b1: resident (f32)
                pl.BlockSpec((Hp, O), lambda i: (0, 0)),    # w2: resident
                pl.BlockSpec((1, O), lambda i: (0, 0)),     # b2: resident (f32)
            ],
            out_specs=pl.BlockSpec((tb, O), lambda i: (i, 0)),
        ),
        compiler_params=pltpu.CompilerParams(
            # Batch tiles are independent -> shard across TCs on v7x megacore.
            dimension_semantics=("parallel",),
            vmem_limit_bytes=vmem_limit,
        ),
    )(x, w1p, b1p, w2p, b2p)


if __name__ == "__main__":
    # Small shapes consistent with the module: input_size=32, hidden=32, output=8
    batch, input_size, hidden_size, output_size = 8, 32, 32, 8

    key = jax.random.PRNGKey(0)
    kx, kw1, kb1, kw2, kb2 = jax.random.split(key, 5)

    x = jax.random.normal(kx, (batch, input_size), dtype=jnp.float32)
    # PyTorch Linear layout: [out, in]
    w1 = jax.random.normal(kw1, (hidden_size, input_size), dtype=jnp.float32) * 0.1
    b1 = jax.random.normal(kb1, (hidden_size,), dtype=jnp.float32) * 0.1
    w2 = jax.random.normal(kw2, (output_size, hidden_size), dtype=jnp.float32) * 0.1
    b2 = jax.random.normal(kb2, (output_size,), dtype=jnp.float32) * 0.1

    # One-time parameter prep (transpose + bf16 cast + hidden-lane pad).
    params = prepare_params(w1, b1, w2, b2)
    params = jax.block_until_ready(params)

    out = simple_nn_forward(x, *params)
    out = jax.block_until_ready(out)

    # Reference check in plain JAX f32 (same math as the PyTorch forward).
    h_ref = jnp.maximum(x @ w1.T + b1, 0.0)
    y_ref = jax.nn.sigmoid(h_ref @ w2.T + b2) * 4.0 + 1.0
    assert out.shape == (batch, output_size)
    # bf16 matmul operands (f32 accumulation) -> loosened tolerance.
    assert jnp.allclose(out, y_ref, atol=2e-2, rtol=2e-2)

    print("KERNEL_OK")
</pallas_src>

<mosaic_0001>
module attributes {stable_mosaic.version = 11 : i64} {
  func.func @simple_nn_kernel(%arg0: i32, %arg1: memref<8x32xf32, #tpu.memory_space<vmem>>, %arg2: memref<32x128xbf16, #tpu.memory_space<vmem>>, %arg3: memref<1x128xf32, #tpu.memory_space<vmem>>, %arg4: memref<128x8xbf16, #tpu.memory_space<vmem>>, %arg5: memref<1x8xf32, #tpu.memory_space<vmem>>, %arg6: memref<8x8xf32, #tpu.memory_space<vmem>>) attributes {dimension_semantics = [#tpu.dimension_semantics<parallel>], iteration_bounds = array<i64: 1>, scalar_prefetch = 0 : i64, scratch_operands = 0 : i64, tpu.core_type = #tpu.core_type<tc>, window_params = [{transform_indices = @transform_0, window_bounds = array<i64: 8, 32>}, {pipeline_mode = #tpu.pipeline_mode<synchronous>, transform_indices = @transform_1, window_bounds = array<i64: 32, 128>}, {pipeline_mode = #tpu.pipeline_mode<synchronous>, transform_indices = @transform_2, window_bounds = array<i64: 1, 128>}, {pipeline_mode = #tpu.pipeline_mode<synchronous>, transform_indices = @transform_3, window_bounds = array<i64: 128, 8>}, {pipeline_mode = #tpu.pipeline_mode<synchronous>, transform_indices = @transform_4, window_bounds = array<i64: 1, 8>}, {transform_indices = @transform_5, window_bounds = array<i64: 8, 8>}]} {
    %c0 = arith.constant 0 : index
    %c0_0 = arith.constant 0 : index
    %0 = vector.load %arg2[%c0, %c0_0] : memref<32x128xbf16, #tpu.memory_space<vmem>>, vector<32x128xbf16>
    %c0_1 = arith.constant 0 : index
    %c0_2 = arith.constant 0 : index
    %1 = vector.load %arg4[%c0_1, %c0_2] : memref<128x8xbf16, #tpu.memory_space<vmem>>, vector<128x8xbf16>
    %c0_3 = arith.constant 0 : index
    %c0_4 = arith.constant 0 : index
    %2 = vector.load %arg1[%c0_3, %c0_4] : memref<8x32xf32, #tpu.memory_space<vmem>>, vector<8x32xf32>
    %3 = arith.truncf %2 : vector<8x32xf32> to vector<8x32xbf16>
    %cst = arith.constant dense<0.000000e+00> : vector<8x128xf32>
    %4 = tpu.matmul %3, %0, %cst {dimension_numbers = #tpu.dot_dimension_numbers<[1], [0], [0], [1], [0, 0, 1, 1], [], []>} : vector<8x32xbf16>, vector<32x128xbf16>, vector<8x128xf32> -> vector<8x128xf32>
    %c0_5 = arith.constant 0 : index
    %c0_6 = arith.constant 0 : index
    %5 = vector.load %arg3[%c0_5, %c0_6] : memref<1x128xf32, #tpu.memory_space<vmem>>, vector<1x128xf32>
    %6 = vector.broadcast %5 : vector<1x128xf32> to vector<8x128xf32>
    %7 = arith.addf %4, %6 : vector<8x128xf32>
    %cst_7 = arith.constant 0.000000e+00 : f32
    %8 = vector.broadcast %cst_7 : f32 to vector<8x128xf32>
    %9 = arith.maximumf %7, %8 : vector<8x128xf32>
    %10 = arith.truncf %9 : vector<8x128xf32> to vector<8x128xbf16>
    %cst_8 = arith.constant dense<0.000000e+00> : vector<8x8xf32>
    %11 = tpu.matmul %10, %1, %cst_8 {dimension_numbers = #tpu.dot_dimension_numbers<[1], [0], [0], [1], [0, 0, 1, 1], [], []>} : vector<8x128xbf16>, vector<128x8xbf16>, vector<8x8xf32> -> vector<8x8xf32>
    %c0_9 = arith.constant 0 : index
    %c0_10 = arith.constant 0 : index
    %12 = vector.load %arg5[%c0_9, %c0_10] : memref<1x8xf32, #tpu.memory_space<vmem>>, vector<1x8xf32>
    %13 = vector.broadcast %12 : vector<1x8xf32> to vector<8x8xf32>
    %14 = arith.addf %11, %13 : vector<8x8xf32>
    %15 = arith.negf %14 : vector<8x8xf32>
    %16 = math.exp %15 : vector<8x8xf32>
    %cst_11 = arith.constant 1.000000e+00 : f32
    %17 = vector.broadcast %cst_11 : f32 to vector<8x8xf32>
    %18 = arith.addf %17, %16 : vector<8x8xf32>
    %19 = arith.divf %17, %18 : vector<8x8xf32>
    %cst_12 = arith.constant 4.000000e+00 : f32
    %20 = vector.broadcast %cst_12 : f32 to vector<8x8xf32>
    %21 = arith.mulf %19, %20 : vector<8x8xf32>
    %cst_13 = arith.constant 1.000000e+00 : f32
    %22 = vector.broadcast %cst_13 : f32 to vector<8x8xf32>
    %23 = arith.addf %21, %22 : vector<8x8xf32>
    %c0_14 = arith.constant 0 : index
    %c0_15 = arith.constant 0 : index
    %24 = vector.load %arg6[%c0_14, %c0_15] : memref<8x8xf32, #tpu.memory_space<vmem>>, vector<8x8xf32>
    tpu.vector_store %arg6[%c0_14, %c0_15], %23 {strides = array<i32>} : memref<8x8xf32, #tpu.memory_space<vmem>>, vector<8x8xf32>,
    return
  }
  func.func @transform_0(%arg0: i32) -> (i32, i32) {
    %c0_i32 = arith.constant 0 : i32
    %c0_i32_0 = arith.constant 0 : i32
    return %arg0, %c0_i32 : i32, i32
  }
  func.func @transform_1(%arg0: i32) -> (i32, i32) {
    %c0_i32 = arith.constant 0 : i32
    %c0_i32_0 = arith.constant 0 : i32
    %c0_i32_1 = arith.constant 0 : i32
    return %c0_i32, %c0_i32_0 : i32, i32
  }
  func.func @transform_2(%arg0: i32) -> (i32, i32) {
    %c0_i32 = arith.constant 0 : i32
    %c0_i32_0 = arith.constant 0 : i32
    %c0_i32_1 = arith.constant 0 : i32
    return %c0_i32, %c0_i32_0 : i32, i32
  }
  func.func @transform_3(%arg0: i32) -> (i32, i32) {
    %c0_i32 = arith.constant 0 : i32
    %c0_i32_0 = arith.constant 0 : i32
    %c0_i32_1 = arith.constant 0 : i32
    return %c0_i32, %c0_i32_0 : i32, i32
  }
  func.func @transform_4(%arg0: i32) -> (i32, i32) {
    %c0_i32 = arith.constant 0 : i32
    %c0_i32_0 = arith.constant 0 : i32
    %c0_i32_1 = arith.constant 0 : i32
    return %c0_i32, %c0_i32_0 : i32, i32
  }
  func.func @transform_5(%arg0: i32) -> (i32, i32) {
    %c0_i32 = arith.constant 0 : i32
    %c0_i32_0 = arith.constant 0 : i32
    return %arg0, %c0_i32 : i32, i32
  }
}

</mosaic_0001>

<llo_original>
// kernel: tpu_custom_call.1
$region0: #{tpu_custom_call.1}
  #allocation0 [shape = 'u32[]', space=smem, size = 0x4, offset = 0x4, fixed_abs, tag = 'smem constant byte address 0x4 - core index']
  #allocation1 [shape = 'u32[144,128]{1,0:T(1,128)}', space=vmem, size = 0x12000, scoped, tag = 'internal scratch']
  %s0 = inlined_call_operand.vmem [shape: f32[8,32], index: 0, kind: input, shape index: {}]
  %s1 = inlined_call_operand.vmem [shape: bf16[32,128], index: 1, kind: input, shape index: {}]
  %s2 = inlined_call_operand.vmem [shape: f32[1,128], index: 2, kind: input, shape index: {}]
  %s3 = inlined_call_operand.vmem [shape: bf16[128,8], index: 3, kind: input, shape index: {}]
  %s4 = inlined_call_operand.vmem [shape: f32[1,8], index: 4, kind: input, shape index: {}]
  %s5 = inlined_call_operand.hbm [shape: f32[8,8], index: 5, kind: output, shape index: {}]
  %s6 = sld [smem:[#allocation0]]
  $region30: #{tpu_custom_call.1} parent=0
    _
  %s8 = ssub.s32 1, %s6
  %s9 = scalar_select 0, %s8, %s6
  $region1: #{tpu_custom_call.1} parent=0
    #allocation2 [shape = 'u8[4096]{0}', space=vmem, size = 0x1000, scoped, tag = 'output window, operand 0, single buffered']
    #allocation3 [shape = 's32[1]{0}', space=sflag, size = 0x4, scoped, tag = 'scoped memory for tpu_custom_call.1']
    %10 = vsyncpa [#allocation3], 0
    // Predicated region
    $region2: #{tpu_custom_call.1} parent=1 // pred_check
      _
    $region3: #{tpu_custom_call.1} parent=1 // pred_check_branch
      %12 = sbr.rel (0) target = $region5
    $region4: #{tpu_custom_call.1} parent=1 // pred_region
      _
    $region5: #{tpu_custom_call.1} parent=1 // pred_fallthru
      _
    // Predicated region
    $region6: #{tpu_custom_call.1} parent=1 // pred_check
      _
    $region7: #{tpu_custom_call.1} parent=1 // pred_check_branch
      %14 = sbr.rel (0) target = $region9
    $region8: #{tpu_custom_call.1} parent=1 // pred_region
      _
    $region9: #{tpu_custom_call.1} parent=1 // pred_fallthru
      _
    // Predicated region
    $region10: #{tpu_custom_call.1} parent=1 // pred_check
      _
    $region11: #{tpu_custom_call.1} parent=1 // pred_check_branch
      %16 = sbr.rel (0) target = $region13
    $region12: #{tpu_custom_call.1} parent=1 // pred_region
      _
    $region13: #{tpu_custom_call.1} parent=1 // pred_fallthru
      _
    // Predicated region
    $region14: #{tpu_custom_call.1} parent=1 // pred_check
      _
    $region15: #{tpu_custom_call.1} parent=1 // pred_check_branch
      %18 = sbr.rel (0) target = $region17
    $region16: #{tpu_custom_call.1} parent=1 // pred_region
      _
    $region17: #{tpu_custom_call.1} parent=1 // pred_fallthru
      _
    // Predicated region
    $region18: #{tpu_custom_call.1} parent=1 // pred_check
      _
    $region19: #{tpu_custom_call.1} parent=1 // pred_check_branch
      %20 = sbr.rel (0) target = $region21
    $region20: #{tpu_custom_call.1} parent=1 // pred_region
      _
    $region21: #{tpu_custom_call.1} parent=1 // pred_fallthru
      _
    %v22 = vld [vmem:[%s1] sm:$0xf]
    %v23 = vld [vmem:[%s1 + $0x4] sm:$0xf]
    %v24 = vld [vmem:[%s1 + $0x8] sm:$0xf]
    %v25 = vld [vmem:[%s1 + $0xc] sm:$0xf]
    %v26 = vld [vmem:[%s3] sm:$0xf]
    %v27 = vld [vmem:[%s3 + $0x4] sm:$0xf]
    %v28 = vld [vmem:[%s3 + $0x8] sm:$0xf]
    %v29 = vld [vmem:[%s3 + $0xc] sm:$0xf]
    %v30 = vld [vmem:[%s3 + $0x10] sm:$0xf]
    %v31 = vld [vmem:[%s3 + $0x14] sm:$0xf]
    %v32 = vld [vmem:[%s3 + $0x18] sm:$0xf]
    %v33 = vld [vmem:[%s3 + $0x1c] sm:$0xf]
    %v34 = vld [vmem:[%s3 + $0x20] sm:$0xf]
    %v35 = vld [vmem:[%s3 + $0x24] sm:$0xf]
    %v36 = vld [vmem:[%s3 + $0x28] sm:$0xf]
    %v37 = vld [vmem:[%s3 + $0x2c] sm:$0xf]
    %v38 = vld [vmem:[%s3 + $0x30] sm:$0xf]
    %v39 = vld [vmem:[%s3 + $0x34] sm:$0xf]
    %v40 = vld [vmem:[%s3 + $0x38] sm:$0xf]
    %v41 = vld [vmem:[%s3 + $0x3c] sm:$0xf]
    %v42 = vld [vmem:[%s0] sm:$0xff]
    %v43 = vpack.c.bf16 %v42, %v42
    %v44 = vld [vmem:[%s2] sm:$0x1]
    %v46 = vlaneseq
    %v47 = vshrl.u32 %v46, 7
    %v48 = vsub.s32 0, %v47
    %v49 = vrot.slane %v44, %v48
    %v55 = vunpack.c.l.b16 %v22
    %v56 = vunpack.c.l.b16 %v23
    %v57 = vunpack.c.l.b16 %v24
    %v58 = vunpack.c.l.b16 %v25
    %v59 = vpack.c.b16 %v56, %v55
    %v60 = vpack.c.b16 %v58, %v57
    %vm63 = vcmask 261120
    %v65 = vsel %vm63, %v43, 0
    %67 = vmatprep.subr.bf16.mxu0 0
    %68 = vmatpush1.bf16.msra.mxu0 %v59
    %69 = vmatprep.subr.bf16.mxu0 0
    %70 = vmatpush1.bf16.msra.mxu0 %v60
    %71 = vmatprep.subr.bf16.mxu0 0
    %72 = vmatpush1.bf16.msra.mxu0 0
    %73 = vmatprep.subr.bf16.mxu0 0
    %74 = vmatpush1.bf16.msra.mxu0 0
    %75 = vmatprep.subr.bf16.mxu0 0
    %76 = vmatpush1.bf16.msra.mxu0 0
    %77 = vmatprep.subr.bf16.mxu0 0
    %78 = vmatpush1.bf16.msra.mxu0 0
    %79 = vmatprep.subr.bf16.mxu0 0
    %80 = vmatpush1.bf16.msra.mxu0 0
    %81 = vmatprep.subr.bf16.mxu0 0
    %82 = vmatpush1.bf16.msra.mxu0 0
    %83 = vmatprep.subr.bf16.mxu0 0
    %84 = vmatpush1.bf16.msra.mxu0 0
    %85 = vmatprep.subr.bf16.mxu0 0
    %86 = vmatpush1.bf16.msra.mxu0 0
    %87 = vmatprep.subr.bf16.mxu0 0
    %88 = vmatpush1.bf16.msra.mxu0 0
    %89 = vmatprep.subr.bf16.mxu0 0
    %90 = vmatpush1.bf16.msra.mxu0 0
    %91 = vmatprep.subr.bf16.mxu0 0
    %92 = vmatpush1.bf16.msra.mxu0 0
    %93 = vmatprep.subr.bf16.mxu0 0
    %94 = vmatpush1.bf16.msra.mxu0 0
    %95 = vmatprep.subr.bf16.mxu0 0
    %96 = vmatpush1.bf16.msra.mxu0 0
    %97 = vmatprep.subr.bf16.mxu0 0
    %98 = vmatpush1.bf16.msra.mxu0 0
    %99 = vmatprep.mubr.bf16.mxu0 0
    %100 = vmatmul.mubr.bf16.gmra.mrb[0].mxu0 %v65
    %v101 = vpop.f32.mrb[0].mxu0
    %v102 = vadd.f32 %v49, %v101
    %v103 = vpop.f32.mrb[0].mxu0
    %v104 = vpop.f32.mrb[0].mxu0
    %v105 = vpop.f32.mrb[0].mxu0
    %106 = vdwg.mxu0
    %v107 = vmax.f32 %v102, 0.0
    %v108 = vpack.c.bf16 %v107, %v107
    %v109 = vld [vmem:[%s4] sm:$0x1]
    %v111 = vlaneseq
    %v112 = vshrl.u32 %v111, 7
    %v113 = vsub.s32 0, %v112
    %v114 = vrot.slane %v109, %v113
    %v132 = vunpack.c.l.b16 %v26
    %v133 = vunpack.c.l.b16 %v27
    %v134 = vunpack.c.l.b16 %v28
    %v135 = vunpack.c.l.b16 %v29
    %v136 = vunpack.c.l.b16 %v30
    %v137 = vunpack.c.l.b16 %v31
    %v138 = vunpack.c.l.b16 %v32
    %v139 = vunpack.c.l.b16 %v33
    %v140 = vunpack.c.l.b16 %v34
    %v141 = vunpack.c.l.b16 %v35
    %v142 = vunpack.c.l.b16 %v36
    %v143 = vunpack.c.l.b16 %v37
    %v144 = vunpack.c.l.b16 %v38
    %v145 = vunpack.c.l.b16 %v39
    %v146 = vunpack.c.l.b16 %v40
    %v147 = vunpack.c.l.b16 %v41
    %v148 = vpack.c.b16 %v133, %v132
    %v149 = vpack.c.b16 %v135, %v134
    %v150 = vpack.c.b16 %v137, %v136
    %v151 = vpack.c.b16 %v139, %v138
    %v152 = vpack.c.b16 %v141, %v140
    %v153 = vpack.c.b16 %v143, %v142
    %v154 = vpack.c.b16 %v145, %v144
    %v155 = vpack.c.b16 %v147, %v146
    %164 = vmatprep.subr.bf16.mxu0 0
    %165 = vmatpush1.bf16.msra.mxu0 %v148
    %166 = vmatprep.subr.bf16.mxu0 0
    %167 = vmatpush1.bf16.msra.mxu0 %v149
    %168 = vmatprep.subr.bf16.mxu0 0
    %169 = vmatpush1.bf16.msra.mxu0 %v150
    %170 = vmatprep.subr.bf16.mxu0 0
    %171 = vmatpush1.bf16.msra.mxu0 %v151
    %172 = vmatprep.subr.bf16.mxu0 0
    %173 = vmatpush1.bf16.msra.mxu0 %v152
    %174 = vmatprep.subr.bf16.mxu0 0
    %175 = vmatpush1.bf16.msra.mxu0 %v153
    %176 = vmatprep.subr.bf16.mxu0 0
    %177 = vmatpush1.bf16.msra.mxu0 %v154
    %178 = vmatprep.subr.bf16.mxu0 0
    %179 = vmatpush1.bf16.msra.mxu0 %v155
    %180 = vmatprep.subr.bf16.mxu0 0
    %181 = vmatpush1.bf16.msra.mxu0 0
    %182 = vmatprep.subr.bf16.mxu0 0
    %183 = vmatpush1.bf16.msra.mxu0 0
    %184 = vmatprep.subr.bf16.mxu0 0
    %185 = vmatpush1.bf16.msra.mxu0 0
    %186 = vmatprep.subr.bf16.mxu0 0
    %187 = vmatpush1.bf16.msra.mxu0 0
    %188 = vmatprep.subr.bf16.mxu0 0
    %189 = vmatpush1.bf16.msra.mxu0 0
    %190 = vmatprep.subr.bf16.mxu0 0
    %191 = vmatpush1.bf16.msra.mxu0 0
    %192 = vmatprep.subr.bf16.mxu0 0
    %193 = vmatpush1.bf16.msra.mxu0 0
    %194 = vmatprep.subr.bf16.mxu0 0
    %195 = vmatpush1.bf16.msra.mxu0 0
    %196 = vmatprep.mubr.bf16.mxu0 0
    %197 = vmatmul.mubr.bf16.gmra.mrb[0].mxu0 %v108
    %v198 = vpop.f32.mrb[0].mxu0
    %v199 = vadd.f32 %v114, %v198
    %v200 = vpop.f32.mrb[0].mxu0
    %v201 = vpop.f32.mrb[0].mxu0
    %v202 = vpop.f32.mrb[0].mxu0
    %203 = vdwg.mxu0
    %v204 = vxor.u32 %v199, 2147483648
    %v205 = vmul.f32 %v204, 1.442695
    %v206 = vpow.pop %v205
    %v207 = vadd.f32 %v206, 1.0
    %v208 = vrcp.pop %v207
    %v209 = vmul.f32 1.0, %v208
    %v210 = vmul.f32 %v209, 4.0
    %v211 = vadd.f32 %v210, 1.0
    %vm212 = vcmask 64512
    %213 = vst.msk [vmem:[#allocation2] sm:$0xff] %vm212, %v211
    // Predicated region
    $region22: #{tpu_custom_call.1} parent=1 // pred_check
      _
    $region23: #{tpu_custom_call.1} parent=1 // pred_check_branch
      %215 = sbr.rel (0) target = $region25
    $region24: #{tpu_custom_call.1} parent=1 // pred_region
      %s217 = ssub.s32 128, 128
      %218 = vsyncadd [#allocation3], %s217
      %s220 = sshll.u32 [#allocation2], 4
      %s221 = int_to_ptr.vmem [resolvable:$true] %s220
      %223 = dma.vmem_to_hbm [thread:$0]  %s221, 128, %s5, [#allocation3]
    $region25: #{tpu_custom_call.1} parent=1 // pred_fallthru
      _
    // Predicated region
    $region26: #{tpu_custom_call.1} parent=1 // pred_check
      _
    $region27: #{tpu_custom_call.1} parent=1 // pred_check_branch
      %225 = sbr.rel (0) target = $region29
    $region28: #{tpu_custom_call.1} parent=1 // pred_region
      %226 = dma.done [#allocation3], 128
    $region29: #{tpu_custom_call.1} parent=1 // pred_fallthru
      _
    %227 = vsyncpa [#allocation3], 1

</llo_original>
